<compile_context>
chip_gen: v5e
topology: v5e:2x2
jax: 0.10.0
libtpu: 0.0.40
codegen_flags: <defaults>
</compile_context>

<pallas_src>
import functools

import jax
import jax.numpy as jnp
from jax.experimental import pallas as pl
from jax.experimental.pallas import tpu as pltpu

GAMMA = 2.0  # module default


def _round_up(x: int, m: int) -> int:
    return ((x + m - 1) // m) * m


def _chip_budgets() -> tuple[int, int]:
    """(single logits buffer byte budget, vmem_limit_bytes), chip-gated."""
    try:
        info = pltpu.get_tpu_info()
        vmem_cap = int(getattr(info, "vmem_capacity_bytes", 0) or 0)
    except Exception:
        vmem_cap = 0
    if vmem_cap >= 96 * 1024 * 1024:
        # v5e / v6e: 128 MiB VMEM per TensorCore -> bigger tiles, higher limit.
        return 4 * 1024 * 1024, 64 * 1024 * 1024
    # v7x (64 MiB per TC) or unknown backend: stay conservative.
    return 2 * 1024 * 1024, 32 * 1024 * 1024


def _focal_loss_kernel(logits_ref, target_ref, out_ref, *,
                       tile_n: int, tiles_per_shard: int, n_true: int,
                       gamma: float, needs_mask: bool):
    # logits_ref: (tile_n, C) native dtype; target_ref: (tile_n, 1) int32
    # out_ref:    (8, 128) f32 accumulator block, resident across the inner
    #             (reduction) grid axis for this shard.
    s = pl.program_id(0)       # shard index ("parallel")
    t_idx = pl.program_id(1)   # tile index within shard ("arbitrary")

    @pl.when(t_idx == 0)
    def _():
        out_ref[...] = jnp.zeros_like(out_ref)

    x = logits_ref[...].astype(jnp.float32)              # (tile_n, C)
    tgt = target_ref[...]                                 # (tile_n, 1) int32

    # Numerically-stable log-softmax pieces; only (tile_n, 1) survives.
    m = jnp.max(x, axis=-1, keepdims=True)                # (tile_n, 1)
    shifted = x - m                                        # (tile_n, C)
    lse = jnp.log(jnp.sum(jnp.exp(shifted), axis=-1, keepdims=True))

    # Gather shifted logit at the target class via a one-hot masked sum.
    cls = jax.lax.broadcasted_iota(jnp.int32, x.shape, 1)
    tgt_shifted = jnp.sum(jnp.where(cls == tgt, shifted, 0.0),
                          axis=-1, keepdims=True)          # (tile_n, 1)

    ce = lse - tgt_shifted                 # per-sample cross-entropy = -log p_t
    pt = jnp.exp(tgt_shifted - lse)        # p_t
    omp = 1.0 - pt
    if gamma == 2.0:
        w = omp * omp                      # cheap VPU multiply (no exp/log)
    elif float(gamma).is_integer() and gamma >= 1:
        w = omp
        for _ in range(int(gamma) - 1):
            w = w * omp
    else:
        w = jnp.power(omp, gamma)
    focal = w * ce                         # (tile_n, 1)

    if needs_mask:
        # Only the ragged tile(s) pay for the mask; everyone else takes the
        # plain accumulation path (gated at runtime by pl.when).
        tile_start = (s * tiles_per_shard + t_idx) * tile_n
        is_ragged = tile_start + tile_n > n_true

        @pl.when(is_ragged)
        def _():
            rows = jax.lax.broadcasted_iota(jnp.int32, focal.shape, 0)
            # Select (not multiply) so NaN/inf from garbage rows is dropped.
            masked = jnp.where(tile_start + rows < n_true, focal, 0.0)
            out_ref[...] += jnp.sum(masked, keepdims=True)

        @pl.when(jnp.logical_not(is_ragged))
        def _():
            out_ref[...] += jnp.sum(focal, keepdims=True)
    else:
        out_ref[...] += jnp.sum(focal, keepdims=True)


def focal_loss(logits: jax.Array, target: jax.Array, *,
               gamma: float = GAMMA, tile_n: int | None = None,
               num_shards: int = 1) -> jax.Array:
    """logits: (N, C) float (f32/bf16), target: (N,) int class indices -> scalar f32."""
    n, c = logits.shape
    target2d = target.astype(jnp.int32).reshape(n, 1)

    buf_budget, vmem_limit = _chip_budgets()
    bytes_per_row = c * logits.dtype.itemsize
    if 2 * 8 * int(bytes_per_row) > vmem_limit:
        # TODO(synk): C-tiled online-logsumexp path for very large C.
        raise NotImplementedError(
            f"C={c} too large for a single (8, C) row tile under the "
            f"{vmem_limit // (1 << 20)} MiB VMEM limit")

    # Tile size: largest row tile within the per-buffer byte budget (double-
    # buffered by the pipeliner), no artificial row cap.
    if tile_n is None:
        tile_n = buf_budget // max(int(bytes_per_row), 1)
    tile_n = max(8, min(int(tile_n), _round_up(n, 8)))
    tile_n = _round_up(tile_n, 8)

    n_tiles = (n + tile_n - 1) // tile_n
    num_shards = max(1, min(int(num_shards), n_tiles))
    tiles_per_shard = (n_tiles + num_shards - 1) // num_shards
    needs_mask = (num_shards * tiles_per_shard * tile_n) != n

    kernel = functools.partial(
        _focal_loss_kernel,
        tile_n=tile_n, tiles_per_shard=tiles_per_shard, n_true=n,
        gamma=gamma, needs_mask=needs_mask)

    # Clamp fully out-of-range tiles (possible only when num_shards > 1) to the
    # last valid block; their rows are zeroed by the in-kernel mask.
    def block_map(s, t):
        return (jnp.minimum(s * tiles_per_shard + t, n_tiles - 1), 0)

    partials = pl.pallas_call(
        kernel,
        out_shape=jax.ShapeDtypeStruct((num_shards * 8, 128), jnp.float32),
        grid=(num_shards, tiles_per_shard),
        in_specs=[
            pl.BlockSpec((tile_n, c), block_map),
            pl.BlockSpec((tile_n, 1), block_map),
        ],
        out_specs=pl.BlockSpec((8, 128), lambda s, t: (s, 0)),
        compiler_params=pltpu.CompilerParams(
            dimension_semantics=("parallel", "arbitrary"),
            vmem_limit_bytes=vmem_limit,
        ),
    )(logits, target2d)

    # Every element of a shard's (8,128) block holds that shard's partial sum:
    # take one representative per shard, sum, divide by the true N (mean).
    shard_sums = partials.reshape(num_shards, 8 * 128)[:, 0]
    return jnp.sum(shard_sums) / n


if __name__ == "__main__":
    key = jax.random.PRNGKey(0)
    k_logits, k_target = jax.random.split(key)

    # Small shapes consistent with a classification head: N=50 frames, C=32
    # classes.  N=50 is deliberately not a multiple of any tile size so the
    # no-pad ragged-tile + in-kernel-mask path is actually exercised.
    N, C = 50, 32
    logits = jax.random.normal(k_logits, (N, C), dtype=jnp.float32)
    target = jax.random.randint(k_target, (N,), 0, C, dtype=jnp.int32)

    # Pure-JAX reference (same math as torch F.cross_entropy + focal weighting).
    logp_ref = jax.nn.log_softmax(logits, axis=-1)
    ce_ref = -jnp.take_along_axis(logp_ref, target[:, None], axis=-1)[:, 0]
    pt_ref = jnp.exp(-ce_ref)
    ref = jnp.mean((1.0 - pt_ref) ** GAMMA * ce_ref)

    # Multi-tile path (ragged last tile, masked in-kernel).
    loss = focal_loss(logits, target, tile_n=16)
    jax.block_until_ready(loss)
    assert jnp.allclose(loss, ref, atol=1e-5, rtol=1e-5), (loss, ref)

    # Default auto-tile path (single ragged tile covering all rows).
    loss2 = focal_loss(logits, target)
    jax.block_until_ready(loss2)
    assert jnp.allclose(loss2, ref, atol=1e-5, rtol=1e-5), (loss2, ref)

    # Two-shard path (for 2-TC chips): includes a fully out-of-range tile that
    # is clamped by the index_map and zeroed by the mask.
    loss3 = focal_loss(logits, target, tile_n=24, num_shards=2)
    jax.block_until_ready(loss3)
    assert jnp.allclose(loss3, ref, atol=1e-5, rtol=1e-5), (loss3, ref)

    print("KERNEL_OK")
</pallas_src>

<mosaic_0001>
module attributes {stable_mosaic.version = 11 : i64} {
  func.func @_focal_loss_kernel(%arg0: i32, %arg1: i32, %arg2: memref<16x32xf32, #tpu.memory_space<vmem>>, %arg3: memref<16x1xi32, #tpu.memory_space<vmem>>, %arg4: memref<8x128xf32, #tpu.memory_space<vmem>>) attributes {dimension_semantics = [#tpu.dimension_semantics<parallel>, #tpu.dimension_semantics<arbitrary>], iteration_bounds = array<i64: 1, 4>, scalar_prefetch = 0 : i64, scratch_operands = 0 : i64, tpu.core_type = #tpu.core_type<tc>, window_params = [{transform_indices = @transform_0, window_bounds = array<i64: 16, 32>}, {transform_indices = @transform_1, window_bounds = array<i64: 16, 1>}, {transform_indices = @transform_2, window_bounds = array<i64: 8, 128>}]} {
    %c0_i32 = arith.constant 0 : i32
    %0 = arith.cmpi eq, %arg1, %c0_i32 : i32
    %1 = arith.extui %0 : i1 to i32
    %c0_i32_0 = arith.constant 0 : i32
    %2 = arith.cmpi ne, %1, %c0_i32_0 : i32
    scf.if %2 {
      %cst_11 = arith.constant 0.000000e+00 : f32
      %37 = vector.broadcast %cst_11 : f32 to vector<8x128xf32>
      %c0_12 = arith.constant 0 : index
      %c0_13 = arith.constant 0 : index
      %38 = vector.load %arg4[%c0_12, %c0_13] : memref<8x128xf32, #tpu.memory_space<vmem>>, vector<8x128xf32>
      tpu.vector_store %arg4[%c0_12, %c0_13], %37 {strides = array<i32>} : memref<8x128xf32, #tpu.memory_space<vmem>>, vector<8x128xf32>,
    } else {
    }
    %c0 = arith.constant 0 : index
    %c0_1 = arith.constant 0 : index
    %3 = vector.load %arg2[%c0, %c0_1] : memref<16x32xf32, #tpu.memory_space<vmem>>, vector<16x32xf32>
    %c0_2 = arith.constant 0 : index
    %c0_3 = arith.constant 0 : index
    %4 = vector.load %arg3[%c0_2, %c0_3] : memref<16x1xi32, #tpu.memory_space<vmem>>, vector<16x1xi32>
    %cst = arith.constant dense<0xFF800000> : vector<16xf32>
    %5 = vector.multi_reduction <maximumf>, %3, %cst [1] : vector<16x32xf32> to vector<16xf32>
    %6 = vector.shape_cast %5 : vector<16xf32> to vector<16x1xf32>
    %7 = vector.broadcast %6 : vector<16x1xf32> to vector<16x32xf32>
    %8 = arith.subf %3, %7 : vector<16x32xf32>
    %9 = math.exp %8 : vector<16x32xf32>
    %cst_4 = arith.constant dense<0.000000e+00> : vector<16xf32>
    %10 = vector.multi_reduction <add>, %9, %cst_4 [1] : vector<16x32xf32> to vector<16xf32>
    %11 = vector.shape_cast %10 : vector<16xf32> to vector<16x1xf32>
    %12 = math.log %11 : vector<16x1xf32>
    %13 = tpu.iota {dimensions = array<i32: 1>} : vector<16x32xi32>
    %14 = vector.broadcast %4 : vector<16x1xi32> to vector<16x32xi32>
    %15 = arith.cmpi eq, %13, %14 : vector<16x32xi32>
    %cst_5 = arith.constant 0.000000e+00 : f32
    %16 = vector.broadcast %cst_5 : f32 to vector<16x32xf32>
    %17 = arith.select %15, %8, %16 : vector<16x32xi1>, vector<16x32xf32>
    %cst_6 = arith.constant dense<0.000000e+00> : vector<16xf32>
    %18 = vector.multi_reduction <add>, %17, %cst_6 [1] : vector<16x32xf32> to vector<16xf32>
    %19 = vector.shape_cast %18 : vector<16xf32> to vector<16x1xf32>
    %20 = arith.subf %12, %19 : vector<16x1xf32>
    %21 = arith.subf %19, %12 : vector<16x1xf32>
    %22 = math.exp %21 : vector<16x1xf32>
    %cst_7 = arith.constant 1.000000e+00 : f32
    %23 = vector.broadcast %cst_7 : f32 to vector<16x1xf32>
    %24 = arith.subf %23, %22 : vector<16x1xf32>
    %25 = arith.mulf %24, %24 : vector<16x1xf32>
    %26 = arith.mulf %25, %20 : vector<16x1xf32>
    %c4_i32 = arith.constant 4 : i32
    %27 = arith.muli %arg0, %c4_i32 : i32
    %28 = arith.addi %27, %arg1 : i32
    %c16_i32 = arith.constant 16 : i32
    %29 = arith.muli %28, %c16_i32 : i32
    %c16_i32_8 = arith.constant 16 : i32
    %30 = arith.addi %29, %c16_i32_8 : i32
    %c50_i32 = arith.constant 50 : i32
    %31 = arith.cmpi sgt, %30, %c50_i32 : i32
    %32 = arith.extui %31 : i1 to i32
    %c0_i32_9 = arith.constant 0 : i32
    %33 = arith.cmpi ne, %32, %c0_i32_9 : i32
    scf.if %33 {
      %37 = tpu.iota {dimensions = array<i32: 0>} : vector<16x1xi32>
      %38 = vector.broadcast %29 : i32 to vector<16x1xi32>
      %39 = arith.addi %38, %37 : vector<16x1xi32>
      %c50_i32_11 = arith.constant 50 : i32
      %40 = vector.broadcast %c50_i32_11 : i32 to vector<16x1xi32>
      %41 = arith.cmpi slt, %39, %40 : vector<16x1xi32>
      %cst_12 = arith.constant 0.000000e+00 : f32
      %42 = vector.broadcast %cst_12 : f32 to vector<16x1xf32>
      %43 = arith.select %41, %26, %42 : vector<16x1xi1>, vector<16x1xf32>
      %c0_13 = arith.constant 0 : index
      %c0_14 = arith.constant 0 : index
      %44 = vector.load %arg4[%c0_13, %c0_14] : memref<8x128xf32, #tpu.memory_space<vmem>>, vector<8x128xf32>
      %45 = vector.shape_cast %43 : vector<16x1xf32> to vector<1x16x1xf32>
      %cst_15 = arith.constant dense<0.000000e+00> : vector<1xf32>
      %46 = vector.multi_reduction <add>, %45, %cst_15 [1, 2] : vector<1x16x1xf32> to vector<1xf32>
      %47 = vector.shape_cast %46 : vector<1xf32> to vector<1x1x1xf32>
      %48 = vector.extract %47[0, 0, 0] : f32 from vector<1x1x1xf32>
      %49 = vector.broadcast %48 : f32 to vector<1x1xf32>
      %50 = vector.broadcast %49 : vector<1x1xf32> to vector<8x128xf32>
      %51 = arith.addf %44, %50 : vector<8x128xf32>
      %c0_16 = arith.constant 0 : index
      %c0_17 = arith.constant 0 : index
      %52 = vector.load %arg4[%c0_16, %c0_17] : memref<8x128xf32, #tpu.memory_space<vmem>>, vector<8x128xf32>
      tpu.vector_store %arg4[%c0_16, %c0_17], %51 {strides = array<i32>} : memref<8x128xf32, #tpu.memory_space<vmem>>, vector<8x128xf32>,
    } else {
    }
    %true = arith.constant true
    %34 = arith.xori %31, %true : i1
    %35 = arith.extui %34 : i1 to i32
    %c0_i32_10 = arith.constant 0 : i32
    %36 = arith.cmpi ne, %35, %c0_i32_10 : i32
    scf.if %36 {
      %c0_11 = arith.constant 0 : index
      %c0_12 = arith.constant 0 : index
      %37 = vector.load %arg4[%c0_11, %c0_12] : memref<8x128xf32, #tpu.memory_space<vmem>>, vector<8x128xf32>
      %38 = vector.shape_cast %26 : vector<16x1xf32> to vector<1x16x1xf32>
      %cst_13 = arith.constant dense<0.000000e+00> : vector<1xf32>
      %39 = vector.multi_reduction <add>, %38, %cst_13 [1, 2] : vector<1x16x1xf32> to vector<1xf32>
      %40 = vector.shape_cast %39 : vector<1xf32> to vector<1x1x1xf32>
      %41 = vector.extract %40[0, 0, 0] : f32 from vector<1x1x1xf32>
      %42 = vector.broadcast %41 : f32 to vector<1x1xf32>
      %43 = vector.broadcast %42 : vector<1x1xf32> to vector<8x128xf32>
      %44 = arith.addf %37, %43 : vector<8x128xf32>
      %c0_14 = arith.constant 0 : index
      %c0_15 = arith.constant 0 : index
      %45 = vector.load %arg4[%c0_14, %c0_15] : memref<8x128xf32, #tpu.memory_space<vmem>>, vector<8x128xf32>
      tpu.vector_store %arg4[%c0_14, %c0_15], %44 {strides = array<i32>} : memref<8x128xf32, #tpu.memory_space<vmem>>, vector<8x128xf32>,
    } else {
    }
    return
  }
  func.func @transform_0(%arg0: i32, %arg1: i32) -> (i32, i32) {
    %c4_i32 = arith.constant 4 : i32
    %0 = arith.muli %arg0, %c4_i32 : i32
    %1 = arith.addi %0, %arg1 : i32
    %c3_i32 = arith.constant 3 : i32
    %2 = arith.minsi %1, %c3_i32 : i32
    %c0_i32 = arith.constant 0 : i32
    %c0_i32_0 = arith.constant 0 : i32
    return %2, %c0_i32 : i32, i32
  }
  func.func @transform_1(%arg0: i32, %arg1: i32) -> (i32, i32) {
    %c4_i32 = arith.constant 4 : i32
    %0 = arith.muli %arg0, %c4_i32 : i32
    %1 = arith.addi %0, %arg1 : i32
    %c3_i32 = arith.constant 3 : i32
    %2 = arith.minsi %1, %c3_i32 : i32
    %c0_i32 = arith.constant 0 : i32
    %c0_i32_0 = arith.constant 0 : i32
    return %2, %c0_i32 : i32, i32
  }
  func.func @transform_2(%arg0: i32, %arg1: i32) -> (i32, i32) {
    %c0_i32 = arith.constant 0 : i32
    %c0_i32_0 = arith.constant 0 : i32
    return %arg0, %c0_i32 : i32, i32
  }
}

</mosaic_0001>

<llo_original>
// kernel: tpu_custom_call.1
$region0: #{tpu_custom_call.1}
  #allocation0 [shape = 'u32[]', space=smem, size = 0x4, offset = 0x4, fixed_abs, tag = 'smem constant byte address 0x4 - core index']
  #allocation1 [shape = 'u32[72,128]{1,0:T(1,128)}', space=vmem, size = 0x9000, scoped, tag = 'internal scratch']
  %s0 = inlined_call_operand.vmem [shape: f32[50,32], index: 0, kind: input, shape index: {}]
  %s1 = inlined_call_operand.vmem [shape: s32[50,1], index: 1, kind: input, shape index: {}]
  %s2 = inlined_call_operand.hbm [shape: f32[8,128], index: 2, kind: output, shape index: {}]
  %s3 = sld [smem:[#allocation0]]
  $region53: #{tpu_custom_call.1} parent=0
    _
  %s5 = ssub.s32 1, %s3
  %s6 = scalar_select 0, %s5, %s3
  $region1: #{tpu_custom_call.1} parent=0
    #allocation2 [shape = 'u8[4096]{0}', space=vmem, size = 0x1000, scoped, tag = 'output window, operand 0, single buffered']
    #allocation3 [shape = 's32[2]{0}', space=sflag, size = 0x8, scoped, tag = 'scoped memory for tpu_custom_call.1']
    %7 = vsyncpa [#allocation3], 0
    loop: start=0, step=1, limit=6
    $region2: #{tpu_custom_call.1} parent=1 // loop_pre_header
      _
    $region3: #{tpu_custom_call.1} parent=1 // loop_header
      %s9 = sphi 0, %s13
      %p10 = scmp.ge.s32.totalorder %s9, 6
      %s16 = sphi 0, %s28
      %s17 = sphi 0, %s24
      %s18 = sphi 0, %s16
      %s19 = sphi 0, %s17
      %s20 = sphi 0, %s18
      %s21 = sphi 0, %s19
      %s39 = sphi 0, %s41
      %s42 = sphi 0, %s39
      %s43 = sphi 0, %s42
      %s59 = sphi 0, %s43
      %s73 = sphi 0, %s75
      %s76 = sphi 0, %s73
      %s77 = sphi 0, %s76
      %s93 = sphi 0, %s77
      %s99 = sphi 0, %s101
      %s102 = sphi 0, %s99
      %s103 = sphi 0, %s102
      %s119 = sphi 0, %s103
    $region4: #{tpu_custom_call.1} parent=1 // loop_header_branch
      %12 = sbr.rel (%p10) target = $region8
    $region5: #{tpu_custom_call.1} parent=1 // loop_body
      %s14 = ssub.s32 %s9, 1
      %s15 = ssub.s32 %s9, 2
      %s22 = sadd.s32 1, %s17
      %p23 = scmp.ge.s32.totalorder %s22, 4
      %s24 = scalar_select %p23, 0, %s22
      %s25 = sadd.s32 1, %s16
      %s26 = scalar_select %p23, %s25, %s16
      %p27 = scmp.ge.s32.totalorder %s26, 1
      %s28 = scalar_select %p27, 0, %s26
      %s29 = smul.u32 %s16, 4
      %s30 = sadd.s32 %s29, %s17
      %p31 = scmp.lt.s32.totalorder %s30, 3
      %s32 = scalar_select %p31, %s30, 3
      %s33 = smul.u32 %s28, 4
      %s34 = sadd.s32 %s33, %s24
      %p35 = scmp.lt.s32.totalorder %s34, 3
      %s36 = scalar_select %p35, %s34, 3
      %s37 = ssub.s32 %s32, %s36
      %p38 = scmp.eq.s32.totalorder %s37, 0
      %s40 = sadd.s32 %s39, 1
      %s41 = scalar_select %p38, %s39, %s40
      %p44 = pneg %p38
      %p45 = scmp.eq.s32.totalorder %s9, 3
      %p46 = por %p44, %p45
      %p47 = scmp.ne.s32.totalorder %s39, %s42
      %p48 = scmp.eq.s32.totalorder %s9, 0
      %p49 = por %p47, %p48
      %p50 = scmp.ne.s32.totalorder %s39, %s42
      %p51 = scmp.eq.s32.totalorder %s14, 3
      %p52 = por %p50, %p51
      %p53 = scmp.ne.s32.totalorder %s42, %s43
      %p54 = scmp.eq.s32.totalorder %s14, 0
      %p55 = por %p53, %p54
      %p56 = scmp.ne.s32.totalorder %s42, %s43
      %p57 = scmp.eq.s32.totalorder %s15, 3
      %p58 = por %p56, %p57
      %p60 = scmp.ne.s32.totalorder %s43, %s59
      %p61 = scmp.eq.s32.totalorder %s15, 0
      %p62 = por %p60, %p61
      %s63 = smul.u32 %s16, 4
      %s64 = sadd.s32 %s63, %s17
      %p65 = scmp.lt.s32.totalorder %s64, 3
      %s66 = scalar_select %p65, %s64, 3
      %s67 = smul.u32 %s28, 4
      %s68 = sadd.s32 %s67, %s24
      %p69 = scmp.lt.s32.totalorder %s68, 3
      %s70 = scalar_select %p69, %s68, 3
      %s71 = ssub.s32 %s66, %s70
      %p72 = scmp.eq.s32.totalorder %s71, 0
      %s74 = sadd.s32 %s73, 1
      %s75 = scalar_select %p72, %s73, %s74
      %p78 = pneg %p72
      %p79 = scmp.eq.s32.totalorder %s9, 3
      %p80 = por %p78, %p79
      %p81 = scmp.ne.s32.totalorder %s73, %s76
      %p82 = scmp.eq.s32.totalorder %s9, 0
      %p83 = por %p81, %p82
      %p84 = scmp.ne.s32.totalorder %s73, %s76
      %p85 = scmp.eq.s32.totalorder %s14, 3
      %p86 = por %p84, %p85
      %p87 = scmp.ne.s32.totalorder %s76, %s77
      %p88 = scmp.eq.s32.totalorder %s14, 0
      %p89 = por %p87, %p88
      %p90 = scmp.ne.s32.totalorder %s76, %s77
      %p91 = scmp.eq.s32.totalorder %s15, 3
      %p92 = por %p90, %p91
      %p94 = scmp.ne.s32.totalorder %s77, %s93
      %p95 = scmp.eq.s32.totalorder %s15, 0
      %p96 = por %p94, %p95
      %s97 = ssub.s32 %s16, %s28
      %p98 = scmp.eq.s32.totalorder %s97, 0
      %s100 = sadd.s32 %s99, 1
      %s101 = scalar_select %p98, %s99, %s100
      %p104 = pneg %p98
      %p105 = scmp.eq.s32.totalorder %s9, 3
      %p106 = por %p104, %p105
      %p107 = scmp.ne.s32.totalorder %s99, %s102
      %p108 = scmp.eq.s32.totalorder %s9, 0
      %p109 = por %p107, %p108
      %p110 = scmp.ne.s32.totalorder %s99, %s102
      %p111 = scmp.eq.s32.totalorder %s14, 3
      %p112 = por %p110, %p111
      %p113 = scmp.ne.s32.totalorder %s102, %s103
      %p114 = scmp.eq.s32.totalorder %s14, 0
      %p115 = por %p113, %p114
      %p116 = scmp.ne.s32.totalorder %s102, %s103
      %p117 = scmp.eq.s32.totalorder %s15, 3
      %p118 = por %p116, %p117
      %p120 = scmp.ne.s32.totalorder %s103, %s119
      %p121 = scmp.eq.s32.totalorder %s15, 0
      %p122 = por %p120, %p121
      %p123 = scmp.le.s32.totalorder 1, %s9
      %p124 = scmp.lt.s32.totalorder %s9, 5
      %p125 = pnand %p123, %p124
      %p126 = pneg %p125
      // Predicated region
      $region9: #{tpu_custom_call.1} parent=5 // pred_check
        _
      $region10: #{tpu_custom_call.1} parent=5 // pred_check_branch
        %128 = sbr.rel (%p125) target = $region12
      $region11: #{tpu_custom_call.1} parent=5 // pred_region
        %s129 = ssub.s32 %s9, 1
      $region12: #{tpu_custom_call.1} parent=5 // pred_fallthru
        _
      %p130 = scmp.lt.s32.totalorder %s9, 4
      // Predicated region
      $region13: #{tpu_custom_call.1} parent=5 // pred_check
        %p131 = pneg %p130
      $region14: #{tpu_custom_call.1} parent=5 // pred_check_branch
        %133 = sbr.rel (%p131) target = $region16
      $region15: #{tpu_custom_call.1} parent=5 // pred_region
        // Predicated region
        $region17: #{tpu_custom_call.1} parent=15 // pred_check
          %p134 = pneg %p49
        $region18: #{tpu_custom_call.1} parent=15 // pred_check_branch
          %136 = sbr.rel (%p134) target = $region20
        $region19: #{tpu_custom_call.1} parent=15 // pred_region
          %s137 = smul.u32 %s16, 4
          %s138 = sadd.s32 %s137, %s17
          %p139 = scmp.lt.s32.totalorder %s138, 3
          %s140 = scalar_select %p139, %s138, 3
          %s141 = smul.u32 2, %s140
          %s142 = ssub.s32 7, %s141
          %p143 = scmp.lt.s32.totalorder %s142, 2
          %s144 = scalar_select %p143, %s142, 2
          %s145 = smul.u32 8, %s144
          %p146 = scmp.lt.s32.totalorder %s141, 6
          %s147 = scalar_select %p146, %s141, 6
          %s148 = smul.addr %s147, 8
          %s149 = scalar_lea.vmem %s0, %s148
          %s150 = smul.u32 %s16, 4
          %s151 = sadd.s32 %s150, %s17
          %p152 = scmp.lt.s32.totalorder %s151, 3
          %s153 = scalar_select %p152, %s151, 3
          %s154 = smul.u32 2, %s153
          %s155 = ssub.s32 7, %s154
          %p156 = scmp.lt.s32.totalorder %s155, 2
          %s157 = scalar_select %p156, %s155, 2
          %s158 = smul.u32 8, %s157
        $region20: #{tpu_custom_call.1} parent=15 // pred_fallthru
          _
        // Predicated region
        $region21: #{tpu_custom_call.1} parent=15 // pred_check
          %p159 = pneg %p83
        $region22: #{tpu_custom_call.1} parent=15 // pred_check_branch
          %161 = sbr.rel (%p159) target = $region24
        $region23: #{tpu_custom_call.1} parent=15 // pred_region
          %s162 = smul.u32 %s16, 4
          %s163 = sadd.s32 %s162, %s17
          %p164 = scmp.lt.s32.totalorder %s163, 3
          %s165 = scalar_select %p164, %s163, 3
          %s166 = smul.u32 2, %s165
          %s167 = ssub.s32 7, %s166
          %p168 = scmp.lt.s32.totalorder %s167, 2
          %s169 = scalar_select %p168, %s167, 2
          %s170 = smul.u32 8, %s169
          %p171 = scmp.lt.s32.totalorder %s166, 6
          %s172 = scalar_select %p171, %s166, 6
          %s173 = smul.addr %s172, 8
          %s174 = scalar_lea.vmem %s1, %s173
          %s175 = smul.u32 %s16, 4
          %s176 = sadd.s32 %s175, %s17
          %p177 = scmp.lt.s32.totalorder %s176, 3
          %s178 = scalar_select %p177, %s176, 3
          %s179 = smul.u32 2, %s178
          %s180 = ssub.s32 7, %s179
          %p181 = scmp.lt.s32.totalorder %s180, 2
          %s182 = scalar_select %p181, %s180, 2
          %s183 = smul.u32 8, %s182
        $region24: #{tpu_custom_call.1} parent=15 // pred_fallthru
          _
      $region16: #{tpu_custom_call.1} parent=5 // pred_fallthru
        _
      %p184 = scmp.le.s32.totalorder 1, %s9
      %p185 = scmp.lt.s32.totalorder %s9, 5
      %p186 = pnand %p184, %p185
      %p187 = pneg %p186
      // Predicated region
      $region25: #{tpu_custom_call.1} parent=5 // pred_check
        _
      $region26: #{tpu_custom_call.1} parent=5 // pred_check_branch
        %189 = sbr.rel (%p186) target = $region28
      $region27: #{tpu_custom_call.1} parent=5 // pred_region
        %s190 = ssub.s32 %s9, 1
        %s191 = smul.u32 %s18, 4
        %s192 = sadd.s32 %s191, %s19
        %p193 = scmp.lt.s32.totalorder %s192, 3
        %s194 = scalar_select %p193, %s192, 3
        %s195 = smul.u32 2, %s194
        %s196 = ssub.s32 7, %s195
        %p197 = scmp.lt.s32.totalorder %s196, 2
        %s198 = scalar_select %p197, %s196, 2
        %s199 = smul.u32 8, %s198
        %p200 = scmp.lt.s32.totalorder %s195, 6
        %s201 = scalar_select %p200, %s195, 6
        %s202 = smul.addr %s201, 8
        %s203 = scalar_lea.vmem %s0, %s202
        %p204 = pneg %p55
        %p205 = pneg %p52
        %s206 = smul.u32 %s18, 4
        %s207 = sadd.s32 %s206, %s19
        %p208 = scmp.lt.s32.totalorder %s207, 3
        %s209 = scalar_select %p208, %s207, 3
        %s210 = smul.u32 2, %s209
        %s211 = ssub.s32 7, %s210
        %p212 = scmp.lt.s32.totalorder %s211, 2
        %s213 = scalar_select %p212, %s211, 2
        %s214 = smul.u32 8, %s213
        %p215 = scmp.lt.s32.totalorder %s210, 6
        %s216 = scalar_select %p215, %s210, 6
        %s217 = smul.addr %s216, 8
        %s218 = scalar_lea.vmem %s1, %s217
        %p219 = pneg %p89
        %p220 = pneg %p86
        %p221 = pneg %p115
        %p222 = pneg %p112
        %s223 = smul.u32 %s18, 4
        %s224 = sadd.s32 %s223, %s19
        %p225 = scmp.lt.s32.totalorder %s224, 3
        %s226 = scalar_select %p225, %s224, 3
        %s227 = smul.u32 2, %s226
        %s228 = ssub.s32 7, %s227
        %p229 = scmp.lt.s32.totalorder %s228, 2
        %s230 = scalar_select %p229, %s228, 2
        %s231 = smul.u32 8, %s230
        %p232 = scmp.lt.s32.totalorder %s227, 6
        %s233 = scalar_select %p232, %s227, 6
        %s234 = smul.addr %s233, 8
        %s235 = scalar_lea.vmem %s0, %s234
        %s236 = smul.u32 %s18, 4
        %s237 = sadd.s32 %s236, %s19
        %p238 = scmp.lt.s32.totalorder %s237, 3
        %s239 = scalar_select %p238, %s237, 3
        %s240 = smul.u32 2, %s239
        %s241 = ssub.s32 7, %s240
        %p242 = scmp.lt.s32.totalorder %s241, 2
        %s243 = scalar_select %p242, %s241, 2
        %s244 = smul.u32 8, %s243
        %s245 = smul.u32 %s18, 4
        %s246 = sadd.s32 %s245, %s19
        %p247 = scmp.lt.s32.totalorder %s246, 3
        %s248 = scalar_select %p247, %s246, 3
        %s249 = smul.u32 2, %s248
        %s250 = ssub.s32 7, %s249
        %p251 = scmp.lt.s32.totalorder %s250, 2
        %s252 = scalar_select %p251, %s250, 2
        %s253 = smul.u32 8, %s252
        %p254 = scmp.lt.s32.totalorder %s249, 6
        %s255 = scalar_select %p254, %s249, 6
        %s256 = smul.addr %s255, 8
        %s257 = scalar_lea.vmem %s1, %s256
        %s258 = smul.u32 %s18, 4
        %s259 = sadd.s32 %s258, %s19
        %p260 = scmp.lt.s32.totalorder %s259, 3
        %s261 = scalar_select %p260, %s259, 3
        %s262 = smul.u32 2, %s261
        %s263 = ssub.s32 7, %s262
        %p264 = scmp.lt.s32.totalorder %s263, 2
        %s265 = scalar_select %p264, %s263, 2
        %s266 = smul.u32 8, %s265
        %p267 = scmp.eq.s32.totalorder %s19, 0
        // Predicated region
        $region29: #{tpu_custom_call.1} parent=27 // pred_check
          %p268 = pneg %p267
        $region30: #{tpu_custom_call.1} parent=27 // pred_check_branch
          %270 = sbr.rel (%p268) target = $region32
        $region31: #{tpu_custom_call.1} parent=27 // pred_region
          %271 = vst [vmem:[#allocation2] sm:$0xff] 0.0
        $region32: #{tpu_custom_call.1} parent=27 // pred_fallthru
          _
        %v272 = vld [vmem:[%s235] sm:$0xff]
        %v273 = vld [vmem:[%s235 + $0x8] sm:$0xff]
        %v274 = vld [vmem:[%s257] sm:$0xff]
        %v275 = vld [vmem:[%s257 + $0x8] sm:$0xff]
        %vm276 = vcmask 261120
        %v277 = vsel %vm276, %v272, -inf
        %278 = vmax.xlane.f32.xlu0 %v277
        %v279 = vpop.xlane.xlu0 %278
        %v280 = vsel %vm276, %v273, -inf
        %281 = vmax.xlane.f32.xlu0 %v280
        %v282 = vpop.xlane.xlu0 %281
        %v283 = vsub.f32 %v272, %v279
        %v284 = vsub.f32 %v273, %v282
        %v285 = vmul.f32 %v283, 1.442695
        %v286 = vpow.pop %v285
        %v287 = vmul.f32 %v284, 1.442695
        %v288 = vpow.pop %v287
        %v289 = vsel %vm276, %v286, 0.0
        %290 = vadd.xlane.f32.xlu0 %v289
        %v291 = vpop.xlane.xlu0 %290
        %v292 = vsel %vm276, %v288, 0.0
        %293 = vadd.xlane.f32.xlu0 %v292
        %v294 = vpop.xlane.xlu0 %293
        %v295 = vlog2.pop %v291
        %v296 = vmul.f32 %v295, 0.6931472
        %v297 = vlog2.pop %v294
        %v298 = vmul.f32 %v297, 0.6931472
        %v299 = vlaneseq
        %v300 = vand.u32 %v299, 127
        %301 = vset.pattern.permute.xlu0 0
        %302 = vperm.xlu0 %301, %v274
        %v303 = vpop.permute.xlu0 %302
        %304 = vset.pattern.permute.xlu0 0
        %305 = vperm.xlu0 %304, %v275
        %v306 = vpop.permute.xlu0 %305
        %vm307 = vcmp.eq.s32.totalorder %v300, %v303
        %vm308 = vcmp.eq.s32.totalorder %v300, %v306
        %v309 = vsel %vm307, %v283, 0.0
        %v310 = vsel %vm308, %v284, 0.0
        %v311 = vsel %vm276, %v309, 0.0
        %312 = vadd.xlane.f32.xlu0 %v311
        %v313 = vpop.xlane.xlu0 %312
        %v314 = vsel %vm276, %v310, 0.0
        %315 = vadd.xlane.f32.xlu0 %v314
        %v316 = vpop.xlane.xlu0 %315
        %v317 = vsub.f32 %v296, %v313
        %v318 = vsub.f32 %v298, %v316
        %v319 = vsub.f32 %v313, %v296
        %v320 = vsub.f32 %v316, %v298
        %v321 = vmul.f32 %v319, 1.442695
        %v322 = vpow.pop %v321
        %v323 = vmul.f32 %v320, 1.442695
        %v324 = vpow.pop %v323
        %v325 = vsub.f32 1.0, %v322
        %v326 = vsub.f32 1.0, %v324
        %v327 = vmul.f32 %v325, %v325
        %v328 = vmul.f32 %v326, %v326
        %v329 = vmul.f32 %v327, %v317
        %v330 = vmul.f32 %v328, %v318
        %s331 = smul.u32 %s18, 4
        %s332 = sadd.s32 %s331, %s19
        %s333 = smul.u32 %s332, 16
        %s334 = sadd.s32 %s333, 16
        %p335 = scmp.gt.s32.totalorder %s334, 50
        // Predicated region
        $region33: #{tpu_custom_call.1} parent=27 // pred_check
          %p336 = pneg %p335
        $region34: #{tpu_custom_call.1} parent=27 // pred_check_branch
          %338 = sbr.rel (%p336) target = $region36
        $region35: #{tpu_custom_call.1} parent=27 // pred_region
          %v339 = vlaneseq
          %v340 = vshrl.u32 %v339, 7
          %v341 = vadd.s32 %v340, 8
          %v342 = vstv %s333
          %v343 = vadd.s32 %v342, %v340
          %v344 = vadd.s32 %v342, %v341
          %vm345 = vcmp.lt.s32.totalorder %v343, 50
          %vm346 = vcmp.lt.s32.totalorder %v344, 50
          %v347 = vsel %vm345, %v329, 0.0
          %v348 = vsel %vm346, %v330, 0.0
          %v349 = vld [vmem:[#allocation2] sm:$0xff]
          %vm350 = vcmask 7168
          %v351 = vsel %vm350, %v347, 0.0
          %v352 = vsel %vm350, %v348, 0.0
          %v353 = vadd.f32 %v351, %v352
          %354 = vadd.xlane.f32.xlu0 %v353
          %v355 = vpop.xlane.xlu0 %354
          %v356 = vrot.slane %v355, 4
          %v357 = vadd.f32 %v355, %v356
          %v358 = vrot.slane %v357, 2
          %v359 = vadd.f32 %v357, %v358
          %v360 = vrot.slane %v359, 1
          %v361 = vadd.f32 %v359, %v360
          %s362 = vtos %v361
          %v363 = vstv %s362
          %v364 = vadd.f32 %v349, %v363
          %365 = vst [vmem:[#allocation2] sm:$0xff] %v364
        $region36: #{tpu_custom_call.1} parent=27 // pred_fallthru
          _
        %p366 = scmp.le.s32.totalorder %s334, 50
        // Predicated region
        $region37: #{tpu_custom_call.1} parent=27 // pred_check
          %p367 = pneg %p366
        $region38: #{tpu_custom_call.1} parent=27 // pred_check_branch
          %369 = sbr.rel (%p367) target = $region40
        $region39: #{tpu_custom_call.1} parent=27 // pred_region
          %v370 = vld [vmem:[#allocation2] sm:$0xff]
          %vm371 = vcmask 7168
          %v372 = vsel %vm371, %v329, 0.0
          %v373 = vsel %vm371, %v330, 0.0
          %v374 = vadd.f32 %v372, %v373
          %375 = vadd.xlane.f32.xlu0 %v374
          %v376 = vpop.xlane.xlu0 %375
          %v377 = vrot.slane %v376, 4
          %v378 = vadd.f32 %v376, %v377
          %v379 = vrot.slane %v378, 2
          %v380 = vadd.f32 %v378, %v379
          %v381 = vrot.slane %v380, 1
          %v382 = vadd.f32 %v380, %v381
          %s383 = vtos %v382
          %v384 = vstv %s383
          %v385 = vadd.f32 %v370, %v384
          %386 = vst [vmem:[#allocation2] sm:$0xff] %v385
        $region40: #{tpu_custom_call.1} parent=27 // pred_fallthru
          _
        // Predicated region
        $region41: #{tpu_custom_call.1} parent=27 // pred_check
          %p387 = pneg %p112
        $region42: #{tpu_custom_call.1} parent=27 // pred_check_branch
          %389 = sbr.rel (%p387) target = $region44
        $region43: #{tpu_custom_call.1} parent=27 // pred_region
          %391 = vsyncadd [#allocation3], 0
          %s392 = smul.addr %s18, 8
          %s393 = scalar_lea.hbm %s2, %s392
          %s395 = sshll.u32 [#allocation2], 4
          %s396 = int_to_ptr.vmem [resolvable:$true] %s395
          %s397 = sshll.u32 %s393, 4
          %s398 = int_to_ptr.hbm [resolvable:$true] %s397
          %400 = dma.vmem_to_hbm [thread:$0]  %s396, 128, %s398, [#allocation3]
        $region44: #{tpu_custom_call.1} parent=27 // pred_fallthru
          _
        // Predicated region
        $region45: #{tpu_custom_call.1} parent=27 // pred_check
          %p401 = pneg %p112
        $region46: #{tpu_custom_call.1} parent=27 // pred_check_branch
          %403 = sbr.rel (%p401) target = $region48
        $region47: #{tpu_custom_call.1} parent=27 // pred_region
          %405 = dma.done [#allocation3], 128
        $region48: #{tpu_custom_call.1} parent=27 // pred_fallthru
          _
      $region28: #{tpu_custom_call.1} parent=5 // pred_fallthru
        _
      %p406 = scmp.le.s32.totalorder 2, %s9
      // Predicated region
      $region49: #{tpu_custom_call.1} parent=5 // pred_check
        %p407 = pneg %p406
      $region50: #{tpu_custom_call.1} parent=5 // pred_check_branch
        %409 = sbr.rel (%p407) target = $region52
      $region51: #{tpu_custom_call.1} parent=5 // pred_region
        %s410 = ssub.s32 %s9, 2
      $region52: #{tpu_custom_call.1} parent=5 // pred_fallthru
        _
    $region6: #{tpu_custom_call.1} parent=1 // loop_footer
      %s13 = sadd.s32 1, %s9
    $region7: #{tpu_custom_call.1} parent=1 // loop_footer_branch
      %8 = sbr.rel target = $region3
    $region8: #{tpu_custom_call.1} parent=1 // loop_exit
      _
    %411 = vsyncpa [#allocation3], 1
    %s412 = scalar_lea.sflag [#allocation3], 1
    %413 = vsyncpa %s412, 1

</llo_original>
